<compile_context>
chip_gen: v5e
topology: v5e:2x2
jax: 0.10.0
libtpu: 0.0.40
codegen_flags: <defaults>
</compile_context>

<pallas_src>
import functools

import jax
import jax.numpy as jnp
from jax.experimental import pallas as pl
from jax.experimental.pallas import tpu as pltpu


def _attention_kernel(x_ref, w1_ref, w2_ref, attn_ref, mean_ref, *, matmul_dtype):
    # Block shapes: x (TB, S, U), w1 (U, A), w2 (A, C),
    #               attn (TB, C, S), mean (TB, U).
    x = x_ref[...]                                            # (TB, S, U) f32
    TB, S, U = x.shape
    C = w2_ref.shape[1]

    # Fold batch into the matmul M dimension: (TB*S, U) @ (U, A) @ (A, C).
    # (Keep S % 8 == 0 at production shapes so these reshapes stay views.)
    x2d = x.reshape(TB * S, U).astype(matmul_dtype)
    w1 = w1_ref[...].astype(matmul_dtype)
    w2 = w2_ref[...].astype(matmul_dtype)
    h = jnp.tanh(jnp.dot(x2d, w1, preferred_element_type=jnp.float32))
    m = jnp.dot(h.astype(matmul_dtype), w2,
                preferred_element_type=jnp.float32)           # (TB*S, C)
    m = m.reshape(TB, S, C)

    # torch: attention_matrix = fc2(...).transpose(1, 2) -> (B, C, S), softmax
    # over the last axis (S).  Equivalent: softmax of m over axis=1 (S axis).
    m_max = jnp.max(m, axis=1, keepdims=True)                 # (TB, 1, C)
    e = jnp.exp(m - m_max)                                    # (TB, S, C)
    denom = jnp.sum(e, axis=1, keepdims=True)                 # (TB, 1, C)
    s_norm = e * pl.reciprocal(denom, approx=True)            # (TB, S, C)

    # Lane-dense store: emit (TB, C, S) directly.  The minor-dim swap lowers
    # to an XLU transpose (separate VLIW slot) instead of a wrapper-side XLA
    # transpose that would cost a full extra HBM pass.
    attn_ref[...] = jnp.transpose(s_norm, (0, 2, 1)).astype(attn_ref.dtype)

    # mean_over_classes(attn_w @ x)[b, u]
    #   = sum_s [(1/C) * sum_c s_norm[b, s, c]] * x[b, s, u]
    # (uses the original f32 x -- unaffected by matmul_dtype).
    w_s = jnp.sum(s_norm, axis=2, keepdims=True) * (1.0 / C)  # (TB, S, 1)
    mean_ref[...] = jnp.sum(w_s * x, axis=1).astype(mean_ref.dtype)  # (TB, U)


def _num_tensorcores():
    """Best-effort TensorCore count per chip (2 on v7x, else 1)."""
    try:
        kind = jax.devices()[0].device_kind.lower()
        if "v7" in kind:
            return 2
    except Exception:
        pass
    return 1


def _vmem_limit_bytes():
    """Explicit scoped-VMEM limit: ~3/4 of physical, capped well below 128MiB."""
    try:
        cap = int(pltpu.get_tpu_info().vmem_capacity_bytes)
    except Exception:
        cap = 64 << 20  # conservative (v7x physical VMEM per TC)
    return min((cap * 3) // 4, 112 << 20)


def _pick_batch_block(B, desired):
    """Largest divisor of B <= desired that keeps the 2D (TB, U) out-spec
    sublane-valid (TB == B or TB % 8 == 0)."""
    desired = max(1, min(desired, B))
    for tb in range(desired, 0, -1):
        if B % tb == 0 and (tb == B or tb % 8 == 0):
            return tb
    return B


def attention_layer(x, w1, w2, *, batch_block=None, matmul_dtype=jnp.bfloat16):
    """HARNN AttentionLayer forward.

    x: (B, S, U); w1: (U, A) = fc1.weight.T; w2: (A, C) = fc2.weight.T.
    Returns (attention_weight (B, C, S), attention_out_mean (B, U)).
    matmul_dtype: dtype for MXU inputs (accumulation is always f32).
    """
    B, S, U = x.shape
    A = w1.shape[1]
    C = w2.shape[1]
    assert w1.shape == (U, A) and w2.shape == (A, C)

    vmem_limit = _vmem_limit_bytes()

    if batch_block is None:
        # Single-TC parts (v5e/v6e): one big block (grid=(1,)) -- fewer grid
        # steps, larger matmul M.  v7x: split 2 ways so both TCs get work.
        n_tc = _num_tensorcores()
        desired = B // n_tc if (n_tc > 1 and B % n_tc == 0) else B
        # Rough per-batch f32 working set (in/out blocks double-buffered plus
        # h / e temporaries); cap batch_block against half the VMEM limit.
        per_b = 4 * (2 * S * U + 2 * S * A + 4 * S * C + 2 * U)
        cap = max(1, (vmem_limit // 2) // max(per_b, 1))
        batch_block = _pick_batch_block(B, min(desired, cap))
    assert B % batch_block == 0, "batch_block must divide B"
    assert batch_block == B or batch_block % 8 == 0, (
        "batch_block must be B or a multiple of 8 (2D mean out-spec sublane dim)")

    grid = (B // batch_block,)

    out_shapes = (
        jax.ShapeDtypeStruct((B, C, S), x.dtype),   # softmax, torch layout
        jax.ShapeDtypeStruct((B, U), x.dtype),      # mean-pooled output
    )

    grid_spec = pltpu.PrefetchScalarGridSpec(
        num_scalar_prefetch=0,
        grid=grid,
        in_specs=[
            pl.BlockSpec((batch_block, S, U), lambda g: (g, 0, 0)),
            # Whole-array, constant-index weight blocks: block index never
            # changes across the grid, so Pallas does not re-DMA them per step.
            pl.BlockSpec((U, A), lambda g: (0, 0)),
            pl.BlockSpec((A, C), lambda g: (0, 0)),
        ],
        out_specs=[
            pl.BlockSpec((batch_block, C, S), lambda g: (g, 0, 0)),
            pl.BlockSpec((batch_block, U), lambda g: (g, 0)),
        ],
    )

    attn_w, mean_out = pl.pallas_call(
        functools.partial(_attention_kernel, matmul_dtype=matmul_dtype),
        out_shape=out_shapes,
        grid_spec=grid_spec,
        compiler_params=pltpu.CompilerParams(
            dimension_semantics=("parallel",),
            vmem_limit_bytes=vmem_limit),
    )(x, w1, w2)

    return attn_w, mean_out


def _reference(x, w1, w2):
    """Pure-JAX reference mirroring the PyTorch forward (f32 end to end)."""
    m = jnp.einsum("bsa,ac->bsc", jnp.tanh(jnp.einsum("bsu,ua->bsa", x, w1)), w2)
    attn_matrix = jnp.transpose(m, (0, 2, 1))                 # (B, C, S)
    attn_w = jax.nn.softmax(attn_matrix, axis=-1)
    attn_out = jnp.einsum("bcs,bsu->bcu", attn_w, x)          # (B, C, U)
    return attn_w, jnp.mean(attn_out, axis=1)                 # (B, U)


if __name__ == "__main__":
    # Small shapes consistent with the module:
    #   batch B=4, seq S=8, num_units U=32, attention_unit_size A=16, classes C=4
    B, S, U, A, C = 4, 8, 32, 16, 4

    key = jax.random.PRNGKey(0)
    kx, k1, k2 = jax.random.split(key, 3)
    x = jax.random.normal(kx, (B, S, U), dtype=jnp.float32)
    # Deterministic parameter init (synthetic; no checkpoint load).
    w1 = jax.random.normal(k1, (U, A), dtype=jnp.float32) * (1.0 / jnp.sqrt(U))
    w2 = jax.random.normal(k2, (A, C), dtype=jnp.float32) * (1.0 / jnp.sqrt(A))

    ref_w, ref_mean = _reference(x, w1, w2)

    # 1) f32 MXU inputs: tight check of the algorithm / layout.
    attn_w32, mean32 = attention_layer(x, w1, w2, matmul_dtype=jnp.float32)
    jax.block_until_ready((attn_w32, mean32))
    assert attn_w32.shape == (B, C, S) and mean32.shape == (B, U)
    # pl.reciprocal(approx=True) trades a few mantissa bits for the EUP slot.
    assert jnp.allclose(attn_w32, ref_w, atol=2e-3, rtol=2e-3)
    assert jnp.allclose(mean32, ref_mean, atol=2e-3, rtol=2e-3)

    # 2) Default (bf16 MXU inputs, f32 accumulation): looser tolerance since
    #    the pre-softmax logits carry bf16 input-rounding error.
    attn_w, attn_mean = attention_layer(x, w1, w2)
    jax.block_until_ready((attn_w, attn_mean))
    assert attn_w.shape == (B, C, S) and attn_mean.shape == (B, U)
    assert jnp.allclose(attn_w, ref_w, atol=5e-2, rtol=5e-2)
    assert jnp.allclose(attn_mean, ref_mean, atol=5e-2, rtol=5e-2)

    print("KERNEL_OK")
</pallas_src>

<mosaic_0001>
module attributes {stable_mosaic.version = 11 : i64} {
  func.func @_attention_kernel(%arg0: i32, %arg1: memref<4x8x32xf32, #tpu.memory_space<vmem>>, %arg2: memref<32x16xf32, #tpu.memory_space<vmem>>, %arg3: memref<16x4xf32, #tpu.memory_space<vmem>>, %arg4: memref<4x4x8xf32, #tpu.memory_space<vmem>>, %arg5: memref<4x32xf32, #tpu.memory_space<vmem>>) attributes {dimension_semantics = [#tpu.dimension_semantics<parallel>], iteration_bounds = array<i64: 1>, scalar_prefetch = 0 : i64, scratch_operands = 0 : i64, tpu.core_type = #tpu.core_type<tc>, window_params = [{transform_indices = @transform_0, window_bounds = array<i64: 4, 8, 32>}, {pipeline_mode = #tpu.pipeline_mode<synchronous>, transform_indices = @transform_1, window_bounds = array<i64: 32, 16>}, {pipeline_mode = #tpu.pipeline_mode<synchronous>, transform_indices = @transform_2, window_bounds = array<i64: 16, 4>}, {transform_indices = @transform_3, window_bounds = array<i64: 4, 4, 8>}, {transform_indices = @transform_4, window_bounds = array<i64: 4, 32>}]} {
    %c0 = arith.constant 0 : index
    %c0_0 = arith.constant 0 : index
    %c0_1 = arith.constant 0 : index
    %0 = vector.load %arg1[%c0, %c0_0, %c0_1] : memref<4x8x32xf32, #tpu.memory_space<vmem>>, vector<4x8x32xf32>
    %1 = vector.shape_cast %0 : vector<4x8x32xf32> to vector<32x32xf32>
    %c0_2 = arith.constant 0 : index
    %c0_3 = arith.constant 0 : index
    %2 = vector.load %arg2[%c0_2, %c0_3] : memref<32x16xf32, #tpu.memory_space<vmem>>, vector<32x16xf32>
    %c0_4 = arith.constant 0 : index
    %c0_5 = arith.constant 0 : index
    %3 = vector.load %arg3[%c0_4, %c0_5] : memref<16x4xf32, #tpu.memory_space<vmem>>, vector<16x4xf32>
    %cst = arith.constant dense<0.000000e+00> : vector<32x16xf32>
    %4 = tpu.matmul %1, %2, %cst {dimension_numbers = #tpu.dot_dimension_numbers<[1], [0], [0], [1], [0, 0, 1, 1], [], []>} : vector<32x32xf32>, vector<32x16xf32>, vector<32x16xf32> -> vector<32x16xf32>
    %5 = math.tanh %4 : vector<32x16xf32>
    %cst_6 = arith.constant dense<0.000000e+00> : vector<32x4xf32>
    %6 = tpu.matmul %5, %3, %cst_6 {dimension_numbers = #tpu.dot_dimension_numbers<[1], [0], [0], [1], [0, 0, 1, 1], [], []>} : vector<32x16xf32>, vector<16x4xf32>, vector<32x4xf32> -> vector<32x4xf32>
    %7 = vector.shape_cast %6 : vector<32x4xf32> to vector<4x8x4xf32>
    %cst_7 = arith.constant dense<0xFF800000> : vector<4x4xf32>
    %8 = vector.multi_reduction <maximumf>, %7, %cst_7 [1] : vector<4x8x4xf32> to vector<4x4xf32>
    %9 = vector.shape_cast %8 : vector<4x4xf32> to vector<4x1x4xf32>
    %10 = vector.broadcast %9 : vector<4x1x4xf32> to vector<4x8x4xf32>
    %11 = arith.subf %7, %10 : vector<4x8x4xf32>
    %12 = math.exp %11 : vector<4x8x4xf32>
    %cst_8 = arith.constant dense<0.000000e+00> : vector<4x4xf32>
    %13 = vector.multi_reduction <add>, %12, %cst_8 [1] : vector<4x8x4xf32> to vector<4x4xf32>
    %14 = vector.shape_cast %13 : vector<4x4xf32> to vector<4x1x4xf32>
    %15 = tpu.reciprocal %14 {approx = true} : vector<4x1x4xf32> -> vector<4x1x4xf32>
    %16 = vector.broadcast %15 : vector<4x1x4xf32> to vector<4x8x4xf32>
    %17 = arith.mulf %12, %16 : vector<4x8x4xf32>
    %18 = tpu.transpose %17, [0, 2, 1] : vector<4x8x4xf32> -> vector<4x4x8xf32>
    %c0_9 = arith.constant 0 : index
    %c0_10 = arith.constant 0 : index
    %c0_11 = arith.constant 0 : index
    %19 = vector.load %arg4[%c0_9, %c0_10, %c0_11] : memref<4x4x8xf32, #tpu.memory_space<vmem>>, vector<4x4x8xf32>
    tpu.vector_store %arg4[%c0_9, %c0_10, %c0_11], %18 {strides = array<i32>} : memref<4x4x8xf32, #tpu.memory_space<vmem>>, vector<4x4x8xf32>,
    %cst_12 = arith.constant dense<0.000000e+00> : vector<4x8xf32>
    %20 = vector.multi_reduction <add>, %17, %cst_12 [2] : vector<4x8x4xf32> to vector<4x8xf32>
    %21 = vector.shape_cast %20 : vector<4x8xf32> to vector<4x8x1xf32>
    %cst_13 = arith.constant 2.500000e-01 : f32
    %22 = vector.broadcast %cst_13 : f32 to vector<4x8x1xf32>
    %23 = arith.mulf %21, %22 : vector<4x8x1xf32>
    %24 = vector.broadcast %23 : vector<4x8x1xf32> to vector<4x8x32xf32>
    %25 = arith.mulf %24, %0 : vector<4x8x32xf32>
    %cst_14 = arith.constant dense<0.000000e+00> : vector<4x32xf32>
    %26 = vector.multi_reduction <add>, %25, %cst_14 [1] : vector<4x8x32xf32> to vector<4x32xf32>
    %c0_15 = arith.constant 0 : index
    %c0_16 = arith.constant 0 : index
    %27 = vector.load %arg5[%c0_15, %c0_16] : memref<4x32xf32, #tpu.memory_space<vmem>>, vector<4x32xf32>
    tpu.vector_store %arg5[%c0_15, %c0_16], %26 {strides = array<i32>} : memref<4x32xf32, #tpu.memory_space<vmem>>, vector<4x32xf32>,
    return
  }
  func.func @transform_0(%arg0: i32) -> (i32, i32, i32) {
    %c0_i32 = arith.constant 0 : i32
    %c0_i32_0 = arith.constant 0 : i32
    %c0_i32_1 = arith.constant 0 : i32
    return %arg0, %c0_i32, %c0_i32_0 : i32, i32, i32
  }
  func.func @transform_1(%arg0: i32) -> (i32, i32) {
    %c0_i32 = arith.constant 0 : i32
    %c0_i32_0 = arith.constant 0 : i32
    %c0_i32_1 = arith.constant 0 : i32
    return %c0_i32, %c0_i32_0 : i32, i32
  }
  func.func @transform_2(%arg0: i32) -> (i32, i32) {
    %c0_i32 = arith.constant 0 : i32
    %c0_i32_0 = arith.constant 0 : i32
    %c0_i32_1 = arith.constant 0 : i32
    return %c0_i32, %c0_i32_0 : i32, i32
  }
  func.func @transform_3(%arg0: i32) -> (i32, i32, i32) {
    %c0_i32 = arith.constant 0 : i32
    %c0_i32_0 = arith.constant 0 : i32
    %c0_i32_1 = arith.constant 0 : i32
    return %arg0, %c0_i32, %c0_i32_0 : i32, i32, i32
  }
  func.func @transform_4(%arg0: i32) -> (i32, i32) {
    %c0_i32 = arith.constant 0 : i32
    %c0_i32_0 = arith.constant 0 : i32
    return %arg0, %c0_i32 : i32, i32
  }
}

</mosaic_0001>

<llo_original>
// kernel: tpu_custom_call.1
$region0: #{tpu_custom_call.1}
  #allocation0 [shape = 'u32[]', space=smem, size = 0x4, offset = 0x4, fixed_abs, tag = 'smem constant byte address 0x4 - core index']
  #allocation1 [shape = 'u32[72,128]{1,0:T(1,128)}', space=vmem, size = 0x9000, scoped, tag = 'internal scratch']
  %s0 = inlined_call_operand.vmem [shape: f32[4,8,32], index: 0, kind: input, shape index: {}]
  %s1 = inlined_call_operand.vmem [shape: f32[32,16], index: 1, kind: input, shape index: {}]
  %s2 = inlined_call_operand.vmem [shape: f32[16,4], index: 2, kind: input, shape index: {}]
  %s3 = inlined_call_operand.hbm [shape: f32[4,4,8], index: 3, kind: output, shape index: {0}]
  %s4 = inlined_call_operand.hbm [shape: f32[4,32], index: 4, kind: output, shape index: {1}]
  %5 = xla_tuple %s3, %s4
  %s6 = sld [smem:[#allocation0]]
  $region30: #{tpu_custom_call.1} parent=0
    _
  %s8 = ssub.s32 1, %s6
  %s9 = scalar_select 0, %s8, %s6
  $region1: #{tpu_custom_call.1} parent=0
    #allocation2 [shape = 'u8[8192]{0}', space=vmem, size = 0x2000, scoped, tag = 'output window, operand 0, single buffered']
    #allocation3 [shape = 's32[1]{0}', space=sflag, size = 0x4, scoped, tag = 'scoped memory for tpu_custom_call.1']
    #allocation4 [shape = 'u8[2048]{0}', space=vmem, size = 0x800, scoped, tag = 'output window, operand 1, single buffered']
    #allocation5 [shape = 's32[1]{0}', space=sflag, size = 0x4, scoped, tag = 'scoped memory for tpu_custom_call.1']
    %10 = vsyncpa [#allocation3], 0
    %11 = vsyncpa [#allocation5], 0
    // Predicated region
    $region2: #{tpu_custom_call.1} parent=1 // pred_check
      _
    $region3: #{tpu_custom_call.1} parent=1 // pred_check_branch
      %13 = sbr.rel (0) target = $region5
    $region4: #{tpu_custom_call.1} parent=1 // pred_region
      _
    $region5: #{tpu_custom_call.1} parent=1 // pred_fallthru
      _
    // Predicated region
    $region6: #{tpu_custom_call.1} parent=1 // pred_check
      _
    $region7: #{tpu_custom_call.1} parent=1 // pred_check_branch
      %15 = sbr.rel (0) target = $region9
    $region8: #{tpu_custom_call.1} parent=1 // pred_region
      _
    $region9: #{tpu_custom_call.1} parent=1 // pred_fallthru
      _
    // Predicated region
    $region10: #{tpu_custom_call.1} parent=1 // pred_check
      _
    $region11: #{tpu_custom_call.1} parent=1 // pred_check_branch
      %17 = sbr.rel (0) target = $region13
    $region12: #{tpu_custom_call.1} parent=1 // pred_region
      _
    $region13: #{tpu_custom_call.1} parent=1 // pred_fallthru
      _
    %v18 = vld [vmem:[%s0] sm:$0xff]
    %v19 = vld [vmem:[%s0 + $0x8] sm:$0xff]
    %v20 = vld [vmem:[%s0 + $0x10] sm:$0xff]
    %v21 = vld [vmem:[%s0 + $0x18] sm:$0xff]
    %v22 = vld [vmem:[%s1] sm:$0xff]
    %v23 = vld [vmem:[%s1 + $0x8] sm:$0xff]
    %v24 = vld [vmem:[%s1 + $0x10] sm:$0xff]
    %v25 = vld [vmem:[%s1 + $0x18] sm:$0xff]
    %v26 = vld [vmem:[%s2] sm:$0xff]
    %v27 = vld [vmem:[%s2 + $0x8] sm:$0xff]
    %vm28 = vcmask 261120
    %v30 = vsel %vm28, %v18, 0
    %v33 = vsel %vm28, %v19, 0
    %v36 = vsel %vm28, %v20, 0
    %v39 = vsel %vm28, %v21, 0
    %41 = vmatpush.msra.mxu0 0.0
    %42 = vmatpush.msra.mxu0 0.0
    %43 = vmatpush.msra.mxu0 0.0
    %44 = vmatpush.msra.mxu0 0.0
    %45 = vmatpush.msra.mxu0 0.0
    %46 = vmatpush.msra.mxu0 0.0
    %47 = vmatpush.msra.mxu0 0.0
    %48 = vmatpush.msra.mxu0 0.0
    %49 = vmatpush.msra.mxu0 0.0
    %50 = vmatpush.msra.mxu0 0.0
    %51 = vmatpush.msra.mxu0 0.0
    %52 = vmatpush.msra.mxu0 0.0
    %53 = vmatpush.msra.mxu0 %v25
    %54 = vmatpush.msra.mxu0 %v24
    %55 = vmatpush.msra.mxu0 %v23
    %56 = vmatpush.msra.mxu0 %v22
    %57 = vmatmul.f32.gmra.mxu0 %v30
    %v58 = vpop.f32.mrf.mxu0
    %v59 = vadd.f32 0.0, %v58
    %60 = vmatmul.f32.gmra.mxu0 %v33
    %v61 = vpop.f32.mrf.mxu0
    %v62 = vadd.f32 0.0, %v61
    %63 = vmatmul.f32.gmra.mxu0 %v36
    %v64 = vpop.f32.mrf.mxu0
    %v65 = vadd.f32 0.0, %v64
    %66 = vmatmul.f32.gmra.mxu0 %v39
    %v67 = vpop.f32.mrf.mxu0
    %v68 = vadd.f32 0.0, %v67
    %69 = vdwg.mxu0
    %v70 = vtanh.pop %v59
    %v71 = vtanh.pop %v62
    %v72 = vtanh.pop %v65
    %v73 = vtanh.pop %v68
    %vm74 = vcmask 130048
    %v76 = vsel %vm74, %v70, 0
    %v79 = vsel %vm74, %v71, 0
    %v82 = vsel %vm74, %v72, 0
    %v85 = vsel %vm74, %v73, 0
    %87 = vmatpush.msra.mxu0 0.0
    %88 = vmatpush.msra.mxu0 0.0
    %89 = vmatpush.msra.mxu0 0.0
    %90 = vmatpush.msra.mxu0 0.0
    %91 = vmatpush.msra.mxu0 0.0
    %92 = vmatpush.msra.mxu0 0.0
    %93 = vmatpush.msra.mxu0 0.0
    %94 = vmatpush.msra.mxu0 0.0
    %95 = vmatpush.msra.mxu0 0.0
    %96 = vmatpush.msra.mxu0 0.0
    %97 = vmatpush.msra.mxu0 0.0
    %98 = vmatpush.msra.mxu0 0.0
    %99 = vmatpush.msra.mxu0 0.0
    %100 = vmatpush.msra.mxu0 0.0
    %101 = vmatpush.msra.mxu0 %v27
    %102 = vmatpush.msra.mxu0 %v26
    %103 = vmatmul.f32.gmra.mxu0 %v76
    %v104 = vpop.f32.mrf.mxu0
    %v105 = vadd.f32 0.0, %v104
    %106 = vmatmul.f32.gmra.mxu0 %v79
    %v107 = vpop.f32.mrf.mxu0
    %v108 = vadd.f32 0.0, %v107
    %109 = vmatmul.f32.gmra.mxu0 %v82
    %v110 = vpop.f32.mrf.mxu0
    %v111 = vadd.f32 0.0, %v110
    %112 = vmatmul.f32.gmra.mxu0 %v85
    %v113 = vpop.f32.mrf.mxu0
    %v114 = vadd.f32 0.0, %v113
    %115 = vdwg.mxu0
    %vm116 = vcmask 31744
    %v117 = vsel %vm116, %v105, -inf
    %v118 = vrot.slane %v117, 4
    %v119 = vmax.f32 %v117, %v118
    %v120 = vrot.slane %v119, 2
    %v121 = vmax.f32 %v119, %v120
    %v122 = vrot.slane %v121, 1
    %v123 = vmax.f32 %v121, %v122
    %v124 = vsel %vm116, %v108, -inf
    %v125 = vrot.slane %v124, 4
    %v126 = vmax.f32 %v124, %v125
    %v127 = vrot.slane %v126, 2
    %v128 = vmax.f32 %v126, %v127
    %v129 = vrot.slane %v128, 1
    %v130 = vmax.f32 %v128, %v129
    %v131 = vsel %vm116, %v111, -inf
    %v132 = vrot.slane %v131, 4
    %v133 = vmax.f32 %v131, %v132
    %v134 = vrot.slane %v133, 2
    %v135 = vmax.f32 %v133, %v134
    %v136 = vrot.slane %v135, 1
    %v137 = vmax.f32 %v135, %v136
    %v138 = vsel %vm116, %v114, -inf
    %v139 = vrot.slane %v138, 4
    %v140 = vmax.f32 %v138, %v139
    %v141 = vrot.slane %v140, 2
    %v142 = vmax.f32 %v140, %v141
    %v143 = vrot.slane %v142, 1
    %v144 = vmax.f32 %v142, %v143
    %v145 = vsub.f32 %v105, %v123
    %v146 = vsub.f32 %v108, %v130
    %v147 = vsub.f32 %v111, %v137
    %v148 = vsub.f32 %v114, %v144
    %v149 = vmul.f32 %v145, 1.442695
    %v150 = vpow.pop %v149
    %v151 = vmul.f32 %v146, 1.442695
    %v152 = vpow.pop %v151
    %v153 = vmul.f32 %v147, 1.442695
    %v154 = vpow.pop %v153
    %v155 = vmul.f32 %v148, 1.442695
    %v156 = vpow.pop %v155
    %v157 = vsel %vm116, %v150, 0.0
    %v158 = vrot.slane %v157, 4
    %v159 = vadd.f32 %v157, %v158
    %v160 = vrot.slane %v159, 2
    %v161 = vadd.f32 %v159, %v160
    %v162 = vrot.slane %v161, 1
    %v163 = vadd.f32 %v161, %v162
    %v164 = vsel %vm116, %v152, 0.0
    %v165 = vrot.slane %v164, 4
    %v166 = vadd.f32 %v164, %v165
    %v167 = vrot.slane %v166, 2
    %v168 = vadd.f32 %v166, %v167
    %v169 = vrot.slane %v168, 1
    %v170 = vadd.f32 %v168, %v169
    %v171 = vsel %vm116, %v154, 0.0
    %v172 = vrot.slane %v171, 4
    %v173 = vadd.f32 %v171, %v172
    %v174 = vrot.slane %v173, 2
    %v175 = vadd.f32 %v173, %v174
    %v176 = vrot.slane %v175, 1
    %v177 = vadd.f32 %v175, %v176
    %v178 = vsel %vm116, %v156, 0.0
    %v179 = vrot.slane %v178, 4
    %v180 = vadd.f32 %v178, %v179
    %v181 = vrot.slane %v180, 2
    %v182 = vadd.f32 %v180, %v181
    %v183 = vrot.slane %v182, 1
    %v184 = vadd.f32 %v182, %v183
    %v185 = vrcp.pop %v163
    %v186 = vrcp.pop %v170
    %v187 = vrcp.pop %v177
    %v188 = vrcp.pop %v184
    %v189 = vmul.f32 %v150, %v185
    %v190 = vmul.f32 %v152, %v186
    %v191 = vmul.f32 %v154, %v187
    %v192 = vmul.f32 %v156, %v188
    %193 = vxpose.xlu0.b32.start [1/16] %v189, 128
    %194 = vxpose.xlu0.b32.cont [2/16] 0.0, 128
    %195 = vxpose.xlu0.b32.cont [3/16] 0.0, 128
    %196 = vxpose.xlu0.b32.cont [4/16] 0.0, 128
    %197 = vxpose.xlu0.b32.cont [5/16] 0.0, 128
    %198 = vxpose.xlu0.b32.cont [6/16] 0.0, 128
    %199 = vxpose.xlu0.b32.cont [7/16] 0.0, 128
    %200 = vxpose.xlu0.b32.cont [8/16] 0.0, 128
    %201 = vxpose.xlu0.b32.cont [9/16] 0.0, 128
    %202 = vxpose.xlu0.b32.cont [10/16] 0.0, 128
    %203 = vxpose.xlu0.b32.cont [11/16] 0.0, 128
    %204 = vxpose.xlu0.b32.cont [12/16] 0.0, 128
    %205 = vxpose.xlu0.b32.cont [13/16] 0.0, 128
    %206 = vxpose.xlu0.b32.cont [14/16] 0.0, 128
    %207 = vxpose.xlu0.b32.cont [15/16] 0.0, 128
    %208 = vxpose.xlu0.b32.end [16/16] 0.0, 128
    %v209 = vpop.trf.xlu0
    %v210 = vpop.trf.xlu0
    %v211 = vpop.trf.xlu0
    %v212 = vpop.trf.xlu0
    %v213 = vpop.trf.xlu0
    %v214 = vpop.trf.xlu0
    %v215 = vpop.trf.xlu0
    %v216 = vpop.trf.xlu0
    %v217 = vpop.trf.xlu0
    %v218 = vpop.trf.xlu0
    %v219 = vpop.trf.xlu0
    %v220 = vpop.trf.xlu0
    %v221 = vpop.trf.xlu0
    %v222 = vpop.trf.xlu0
    %v223 = vpop.trf.xlu0
    %v224 = vpop.trf.xlu0
    %225 = vxpose.xlu0.b32.start [1/16] %v190, 128
    %226 = vxpose.xlu0.b32.cont [2/16] 0.0, 128
    %227 = vxpose.xlu0.b32.cont [3/16] 0.0, 128
    %228 = vxpose.xlu0.b32.cont [4/16] 0.0, 128
    %229 = vxpose.xlu0.b32.cont [5/16] 0.0, 128
    %230 = vxpose.xlu0.b32.cont [6/16] 0.0, 128
    %231 = vxpose.xlu0.b32.cont [7/16] 0.0, 128
    %232 = vxpose.xlu0.b32.cont [8/16] 0.0, 128
    %233 = vxpose.xlu0.b32.cont [9/16] 0.0, 128
    %234 = vxpose.xlu0.b32.cont [10/16] 0.0, 128
    %235 = vxpose.xlu0.b32.cont [11/16] 0.0, 128
    %236 = vxpose.xlu0.b32.cont [12/16] 0.0, 128
    %237 = vxpose.xlu0.b32.cont [13/16] 0.0, 128
    %238 = vxpose.xlu0.b32.cont [14/16] 0.0, 128
    %239 = vxpose.xlu0.b32.cont [15/16] 0.0, 128
    %240 = vxpose.xlu0.b32.end [16/16] 0.0, 128
    %v241 = vpop.trf.xlu0
    %v242 = vpop.trf.xlu0
    %v243 = vpop.trf.xlu0
    %v244 = vpop.trf.xlu0
    %v245 = vpop.trf.xlu0
    %v246 = vpop.trf.xlu0
    %v247 = vpop.trf.xlu0
    %v248 = vpop.trf.xlu0
    %v249 = vpop.trf.xlu0
    %v250 = vpop.trf.xlu0
    %v251 = vpop.trf.xlu0
    %v252 = vpop.trf.xlu0
    %v253 = vpop.trf.xlu0
    %v254 = vpop.trf.xlu0
    %v255 = vpop.trf.xlu0
    %v256 = vpop.trf.xlu0
    %257 = vxpose.xlu0.b32.start [1/16] %v191, 128
    %258 = vxpose.xlu0.b32.cont [2/16] 0.0, 128
    %259 = vxpose.xlu0.b32.cont [3/16] 0.0, 128
    %260 = vxpose.xlu0.b32.cont [4/16] 0.0, 128
    %261 = vxpose.xlu0.b32.cont [5/16] 0.0, 128
    %262 = vxpose.xlu0.b32.cont [6/16] 0.0, 128
    %263 = vxpose.xlu0.b32.cont [7/16] 0.0, 128
    %264 = vxpose.xlu0.b32.cont [8/16] 0.0, 128
    %265 = vxpose.xlu0.b32.cont [9/16] 0.0, 128
    %266 = vxpose.xlu0.b32.cont [10/16] 0.0, 128
    %267 = vxpose.xlu0.b32.cont [11/16] 0.0, 128
    %268 = vxpose.xlu0.b32.cont [12/16] 0.0, 128
    %269 = vxpose.xlu0.b32.cont [13/16] 0.0, 128
    %270 = vxpose.xlu0.b32.cont [14/16] 0.0, 128
    %271 = vxpose.xlu0.b32.cont [15/16] 0.0, 128
    %272 = vxpose.xlu0.b32.end [16/16] 0.0, 128
    %v273 = vpop.trf.xlu0
    %v274 = vpop.trf.xlu0
    %v275 = vpop.trf.xlu0
    %v276 = vpop.trf.xlu0
    %v277 = vpop.trf.xlu0
    %v278 = vpop.trf.xlu0
    %v279 = vpop.trf.xlu0
    %v280 = vpop.trf.xlu0
    %v281 = vpop.trf.xlu0
    %v282 = vpop.trf.xlu0
    %v283 = vpop.trf.xlu0
    %v284 = vpop.trf.xlu0
    %v285 = vpop.trf.xlu0
    %v286 = vpop.trf.xlu0
    %v287 = vpop.trf.xlu0
    %v288 = vpop.trf.xlu0
    %289 = vxpose.xlu0.b32.start [1/16] %v192, 128
    %290 = vxpose.xlu0.b32.cont [2/16] 0.0, 128
    %291 = vxpose.xlu0.b32.cont [3/16] 0.0, 128
    %292 = vxpose.xlu0.b32.cont [4/16] 0.0, 128
    %293 = vxpose.xlu0.b32.cont [5/16] 0.0, 128
    %294 = vxpose.xlu0.b32.cont [6/16] 0.0, 128
    %295 = vxpose.xlu0.b32.cont [7/16] 0.0, 128
    %296 = vxpose.xlu0.b32.cont [8/16] 0.0, 128
    %297 = vxpose.xlu0.b32.cont [9/16] 0.0, 128
    %298 = vxpose.xlu0.b32.cont [10/16] 0.0, 128
    %299 = vxpose.xlu0.b32.cont [11/16] 0.0, 128
    %300 = vxpose.xlu0.b32.cont [12/16] 0.0, 128
    %301 = vxpose.xlu0.b32.cont [13/16] 0.0, 128
    %302 = vxpose.xlu0.b32.cont [14/16] 0.0, 128
    %303 = vxpose.xlu0.b32.cont [15/16] 0.0, 128
    %304 = vxpose.xlu0.b32.end [16/16] 0.0, 128
    %v305 = vpop.trf.xlu0
    %v306 = vpop.trf.xlu0
    %v307 = vpop.trf.xlu0
    %v308 = vpop.trf.xlu0
    %v309 = vpop.trf.xlu0
    %v310 = vpop.trf.xlu0
    %v311 = vpop.trf.xlu0
    %v312 = vpop.trf.xlu0
    %v313 = vpop.trf.xlu0
    %v314 = vpop.trf.xlu0
    %v315 = vpop.trf.xlu0
    %v316 = vpop.trf.xlu0
    %v317 = vpop.trf.xlu0
    %v318 = vpop.trf.xlu0
    %v319 = vpop.trf.xlu0
    %v320 = vpop.trf.xlu0
    %vm321 = vcmask 60416
    %322 = vst.msk [vmem:[#allocation2] sm:$0xf] %vm321, %v209
    %323 = vst.msk [vmem:[#allocation2 + $0x4] sm:$0xf] %vm321, %v241
    %324 = vst.msk [vmem:[#allocation2 + $0x8] sm:$0xf] %vm321, %v273
    %325 = vst.msk [vmem:[#allocation2 + $0xc] sm:$0xf] %vm321, %v305
    %v326 = vsel %vm116, %v189, 0.0
    %327 = vadd.xlane.f32.xlu0 %v326
    %v328 = vpop.xlane.xlu0 %327
    %v329 = vsel %vm116, %v190, 0.0
    %330 = vadd.xlane.f32.xlu0 %v329
    %v331 = vpop.xlane.xlu0 %330
    %v332 = vsel %vm116, %v191, 0.0
    %333 = vadd.xlane.f32.xlu0 %v332
    %v334 = vpop.xlane.xlu0 %333
    %v335 = vsel %vm116, %v192, 0.0
    %336 = vadd.xlane.f32.xlu0 %v335
    %v337 = vpop.xlane.xlu0 %336
    %v338 = vmul.f32 %v328, 0.25
    %v339 = vmul.f32 %v331, 0.25
    %v340 = vmul.f32 %v334, 0.25
    %v341 = vmul.f32 %v337, 0.25
    %v342 = vmul.f32 %v338, %v18
    %v343 = vmul.f32 %v339, %v19
    %v344 = vmul.f32 %v340, %v20
    %v345 = vmul.f32 %v341, %v21
    %v346 = vsel %vm28, %v342, 0.0
    %v347 = vrot.slane %v346, 4
    %v348 = vadd.f32 %v346, %v347
    %v349 = vrot.slane %v348, 2
    %v350 = vadd.f32 %v348, %v349
    %v351 = vrot.slane %v350, 1
    %v352 = vadd.f32 %v350, %v351
    %v353 = vsel %vm28, %v343, 0.0
    %v354 = vrot.slane %v353, 4
    %v355 = vadd.f32 %v353, %v354
    %v356 = vrot.slane %v355, 2
    %v357 = vadd.f32 %v355, %v356
    %v358 = vrot.slane %v357, 1
    %v359 = vadd.f32 %v357, %v358
    %v360 = vsel %vm28, %v344, 0.0
    %v361 = vrot.slane %v360, 4
    %v362 = vadd.f32 %v360, %v361
    %v363 = vrot.slane %v362, 2
    %v364 = vadd.f32 %v362, %v363
    %v365 = vrot.slane %v364, 1
    %v366 = vadd.f32 %v364, %v365
    %v367 = vsel %vm28, %v345, 0.0
    %v368 = vrot.slane %v367, 4
    %v369 = vadd.f32 %v367, %v368
    %v370 = vrot.slane %v369, 2
    %v371 = vadd.f32 %v369, %v370
    %v372 = vrot.slane %v371, 1
    %v373 = vadd.f32 %v371, %v372
    %vm378 = vcmask 1041409
    %v379 = vsel %vm378, %v359, %v352
    %vm380 = vcmask 1042434
    %v381 = vsel %vm380, %v366, %v379
    %vm382 = vcmask 1043459
    %v383 = vsel %vm382, %v373, %v381
    %vm385 = vcmask 257024
    %386 = vst.msk [vmem:[#allocation4] sm:$0xf] %vm385, %v383
    // Predicated region
    $region14: #{tpu_custom_call.1} parent=1 // pred_check
      _
    $region15: #{tpu_custom_call.1} parent=1 // pred_check_branch
      %388 = sbr.rel (0) target = $region17
    $region16: #{tpu_custom_call.1} parent=1 // pred_region
      %390 = vsyncadd [#allocation3], 0
      %s391 = sshll.u32 [#allocation2], 4
      %s392 = int_to_ptr.vmem [resolvable:$true] %s391
      %s393 = sshll.u32 %s3, 4
      %s394 = int_to_ptr.hbm [resolvable:$true] %s393
      %399 = dma.vmem_to_hbm [thread:$0]  %s392, 256, %s394, [#allocation3], 64, 64, 4
    $region17: #{tpu_custom_call.1} parent=1 // pred_fallthru
      _
    // Predicated region
    $region18: #{tpu_custom_call.1} parent=1 // pred_check
      _
    $region19: #{tpu_custom_call.1} parent=1 // pred_check_branch
      %401 = sbr.rel (0) target = $region21
    $region20: #{tpu_custom_call.1} parent=1 // pred_region
      %403 = vsyncadd [#allocation5], 0
      %s405 = sshll.u32 [#allocation4], 4
      %s406 = int_to_ptr.vmem [resolvable:$true] %s405
      %s407 = sshll.u32 %s4, 4
      %s408 = int_to_ptr.hbm [resolvable:$true] %s407
      %410 = dma.vmem_to_hbm [thread:$0]  %s406, 64, %s408, [#allocation5]
    $region21: #{tpu_custom_call.1} parent=1 // pred_fallthru
      _
    // Predicated region
    $region22: #{tpu_custom_call.1} parent=1 // pred_check
      _
    $region23: #{tpu_custom_call.1} parent=1 // pred_check_branch
      %412 = sbr.rel (0) target = $region25
    $region24: #{tpu_custom_call.1} parent=1 // pred_region
      %414 = dma.done [#allocation3], 256
    $region25: #{tpu_custom_call.1} parent=1 // pred_fallthru
      _
    // Predicated region
    $region26: #{tpu_custom_call.1} parent=1 // pred_check
      _
    $region27: #{tpu_custom_call.1} parent=1 // pred_check_branch
      %416 = sbr.rel (0) target = $region29
    $region28: #{tpu_custom_call.1} parent=1 // pred_region
      %418 = dma.done [#allocation5], 64
    $region29: #{tpu_custom_call.1} parent=1 // pred_fallthru
      _
    %419 = vsyncpa [#allocation3], 1
    %420 = vsyncpa [#allocation5], 1

</llo_original>
